<compile_context>
chip_gen: v7x
topology: tpu7x:2x2x1
jax: 0.10.0
libtpu: 0.0.40
codegen_flags: <defaults>
</compile_context>

<pallas_src>
import jax
import jax.numpy as jnp
from jax import lax
from jax.experimental import pallas as pl
from jax.experimental.pallas import tpu as pltpu

EMBED_DIM = 64
LANE = 128
SUBLANE = 8
# Set to jnp.bfloat16 to feed the MXU bf16 operands (fewer MXU passes on the
# serial chain); kept at f32 so the 1e-4 tolerance check stays valid.
MXU_DTYPE = jnp.float32


def _round_up(x, m):
    return ((x + m - 1) // m) * m


def lstm_fc_kernel(tok_ref, proj_ref, whh_ref, wfc_ref, bfc_ref, out_ref):
    """Fused embedding gather + LSTM recurrence + final Linear.

    tok_ref : (seq*BP, 1)      int32  time-major, batch-padded token ids
    proj_ref: (VOCAB_PAD, 4H)  f32    E @ W_ih^T + b_ih + b_hh (rows >= vocab are 0)
    whh_ref : (HPAD, 4H)              W_hh^T, rows [H, HPAD) are 0
    wfc_ref : (HPAD, OUT_PAD)         fc.weight^T, zero padded
    bfc_ref : (1, OUT_PAD)     f32    fc.bias, zero padded
    out_ref : (BP, OUT_PAD)    f32
    """
    sb = tok_ref.shape[0]
    bp = out_ref.shape[0]
    seq = sb // bp
    vocab_pad, gdim = proj_ref.shape
    hidden = gdim // 4

    # ---- Fused embedding lookup + input projection (off the serial chain) --
    # one_hot(tok) @ proj_table computed once for the whole (seq, batch) block.
    tok = tok_ref[...]                                            # (sb, 1) int32
    vocab_iota = lax.broadcasted_iota(jnp.int32, (sb, vocab_pad), 1)
    onehot = (tok == vocab_iota).astype(jnp.float32)              # (sb, VOCAB_PAD)
    xw_all = jnp.dot(onehot, proj_ref[...],
                     preferred_element_type=jnp.float32)          # (sb, 4H)

    # Recurrent weight loaded once, resident across all time steps.
    whh = whh_ref[...]                                            # (HPAD, 4H)

    lane = lax.broadcasted_iota(jnp.int32, (bp, gdim), 1)
    g_mask = (lane >= 2 * hidden) & (lane < 3 * hidden)           # g-gate columns

    # h/c live at full gate width (128 lanes); only lanes [0, H) are "real",
    # the rest stay bounded junk that zero weight rows annihilate.
    h = jnp.zeros((bp, gdim), jnp.float32)
    c = jnp.zeros((bp, gdim), jnp.float32)

    # seq is small and static: fully unroll so the per-step xw slices are
    # static, sublane-aligned, and the scheduler can overlap adjacent steps'
    # MXU / EUP / XLU work.
    for t in range(seq):
        xw_t = xw_all[t * bp:(t + 1) * bp, :]                     # (bp, 4H)
        gates = xw_t + jnp.dot(h.astype(whh.dtype), whh,
                               preferred_element_type=jnp.float32)
        # Full-vreg EUP activations + one lane-masked select: [i | f | g | o].
        # TODO(synk): for H >= 128, reorder gates to [i,f,o | g] so one
        # sigmoid covers 3H and one tanh covers H instead of 2*4H EUP lanes.
        act = jnp.where(g_mask, jnp.tanh(gates), jax.nn.sigmoid(gates))
        # Align the f / g / o blocks onto lanes [0, H) with XLU rolls
        # (np.roll semantics: out[j] = in[(j - shift) mod gdim]).
        f_al = pltpu.roll(act, shift=gdim - 1 * hidden, axis=1)   # f -> [0, H)
        g_al = pltpu.roll(act, shift=gdim - 2 * hidden, axis=1)   # g -> [0, H)
        o_al = pltpu.roll(act, shift=gdim - 3 * hidden, axis=1)   # o -> [0, H)
        c = f_al * c + act * g_al          # lanes [0,H): f*c + i*g
        h = o_al * jnp.tanh(c)             # lanes [0,H): o*tanh(c)

    # Final FC on the last hidden state; zero-padded weight rows/cols make
    # this a single unmasked full (BP, OUT_PAD) tile store.
    out_ref[...] = (
        jnp.dot(h.astype(wfc_ref.dtype), wfc_ref[...],
                preferred_element_type=jnp.float32)
        + bfc_ref[...]
    )


def make_params(input_size, hidden_size, output_size):
    """Deterministic synthetic parameters matching nn.Embedding/nn.LSTM/nn.Linear."""
    keys = jax.random.split(jax.random.PRNGKey(42), 7)
    scale = 0.1
    return {
        "embedding": scale * jax.random.normal(keys[0], (input_size, EMBED_DIM), jnp.float32),
        "w_ih": scale * jax.random.normal(keys[1], (4 * hidden_size, EMBED_DIM), jnp.float32),
        "w_hh": scale * jax.random.normal(keys[2], (4 * hidden_size, hidden_size), jnp.float32),
        "b_ih": scale * jax.random.normal(keys[3], (4 * hidden_size,), jnp.float32),
        "b_hh": scale * jax.random.normal(keys[4], (4 * hidden_size,), jnp.float32),
        "fc_w": scale * jax.random.normal(keys[5], (output_size, hidden_size), jnp.float32),
        "fc_b": scale * jax.random.normal(keys[6], (output_size,), jnp.float32),
    }


def prepare_params(params):
    """Parameter-only preprocessing, hoisted out of the per-call path.

    Run once whenever the weights change; the result is what
    rnn_model_forward consumes directly.
    """
    vocab = params["embedding"].shape[0]
    gdim, hidden = params["w_hh"].shape
    out_dim = params["fc_w"].shape[0]

    vocab_pad = _round_up(vocab, LANE)
    out_pad = _round_up(out_dim, LANE)
    hpad = gdim  # h/c carries live at full gate width

    # Embedding rows pre-projected through W_ih with both biases folded in.
    proj = (jnp.dot(params["embedding"], params["w_ih"].T)
            + params["b_ih"] + params["b_hh"]).astype(jnp.float32)    # (vocab, 4H)
    proj_pad = jnp.zeros((vocab_pad, gdim), jnp.float32).at[:vocab].set(proj)

    whh_pad = jnp.zeros((hpad, gdim), MXU_DTYPE).at[:hidden].set(
        params["w_hh"].T.astype(MXU_DTYPE))
    wfc_pad = jnp.zeros((hpad, out_pad), MXU_DTYPE).at[:hidden, :out_dim].set(
        params["fc_w"].T.astype(MXU_DTYPE))
    bfc_pad = jnp.zeros((1, out_pad), jnp.float32).at[0, :out_dim].set(
        params["fc_b"].astype(jnp.float32))

    return {"proj": proj_pad, "whh": whh_pad, "wfc": wfc_pad, "bfc": bfc_pad}


def rnn_model_forward(tokens, prep, *, out_dim):
    """tokens: (batch, seq) int32 -> (batch, out_dim) float32."""
    batch, seq = tokens.shape
    vocab_pad, gdim = prep["proj"].shape
    hpad = prep["whh"].shape[0]
    out_pad = prep["wfc"].shape[1]
    batch_pad = _round_up(batch, SUBLANE)

    # Pad batch to a full sublane group and flatten time-major so the kernel's
    # per-step xw slices are contiguous (8,128) tiles.  Token id 0 in the pad
    # rows is harmless (rows are sliced off below).
    tok_p = jnp.zeros((batch_pad, seq), jnp.int32).at[:batch].set(
        tokens.astype(jnp.int32))
    tok_flat = tok_p.T.reshape(seq * batch_pad, 1)

    cost = pl.CostEstimate(
        flops=(2 * seq * batch_pad * vocab_pad * gdim          # one-hot @ proj
               + 2 * seq * batch_pad * hpad * gdim             # recurrence
               + 2 * batch_pad * hpad * out_pad),              # final FC
        transcendentals=seq * batch_pad * 3 * gdim,
        bytes_accessed=4 * (seq * batch_pad + vocab_pad * gdim + hpad * gdim
                            + hpad * out_pad + out_pad + batch_pad * out_pad),
    )

    vmem = pl.BlockSpec(memory_space=pltpu.MemorySpace.VMEM)
    # Grid-less: everything fits comfortably in VMEM at these toy shapes.
    # TODO(synk): for large batch/seq, add a batch grid axis with
    # dimension_semantics=("parallel",) (v7x dual TensorCores) and a time-axis
    # BlockSpec so xw streaming stays within v7x's 64 MiB VMEM.
    out_padded = pl.pallas_call(
        lstm_fc_kernel,
        out_shape=jax.ShapeDtypeStruct((batch_pad, out_pad), jnp.float32),
        in_specs=[vmem] * 5,
        out_specs=vmem,
        cost_estimate=cost,
    )(tok_flat, prep["proj"], prep["whh"], prep["wfc"], prep["bfc"])
    # Wrapper contract: padded rows/columns are dead; slice to the exact view.
    return out_padded[:batch, :out_dim]


def rnn_model_reference(tokens, params):
    """Pure-JAX reference mirroring the PyTorch forward semantics."""
    emb = jnp.take(params["embedding"], tokens, axis=0)
    batch = tokens.shape[0]
    hidden = params["w_hh"].shape[1]
    h = jnp.zeros((batch, hidden), jnp.float32)
    c = jnp.zeros((batch, hidden), jnp.float32)
    b = params["b_ih"] + params["b_hh"]
    for t in range(tokens.shape[1]):
        x_t = emb[:, t, :]
        gates = x_t @ params["w_ih"].T + h @ params["w_hh"].T + b
        i_g = jax.nn.sigmoid(gates[:, 0 * hidden:1 * hidden])
        f_g = jax.nn.sigmoid(gates[:, 1 * hidden:2 * hidden])
        g_g = jnp.tanh(gates[:, 2 * hidden:3 * hidden])
        o_g = jax.nn.sigmoid(gates[:, 3 * hidden:4 * hidden])
        c = f_g * c + i_g * g_g
        h = o_g * jnp.tanh(c)
    return h @ params["fc_w"].T + params["fc_b"]


if __name__ == "__main__":
    input_size = 16    # vocab size
    hidden_size = 32
    output_size = 4
    batch, seq = 2, 8

    params = make_params(input_size, hidden_size, output_size)
    prep = prepare_params(params)   # one-time, outside the per-call path
    tokens = jax.random.randint(jax.random.PRNGKey(0), (batch, seq), 0, input_size,
                                dtype=jnp.int32)

    fwd = jax.jit(rnn_model_forward, static_argnames=("out_dim",))
    out = fwd(tokens, prep, out_dim=output_size)
    out = jax.block_until_ready(out)

    ref = rnn_model_reference(tokens, params)
    assert out.shape == (batch, output_size)
    assert jnp.allclose(out, ref, rtol=1e-4, atol=1e-4), "mismatch vs reference"

    print("KERNEL_OK")
</pallas_src>

<mosaic_0001>
module attributes {stable_mosaic.version = 11 : i64} {
  func.func @lstm_fc_kernel(%arg0: memref<64x1xi32, #tpu.memory_space<vmem>>, %arg1: memref<128x128xf32, #tpu.memory_space<vmem>>, %arg2: memref<128x128xf32, #tpu.memory_space<vmem>>, %arg3: memref<128x128xf32, #tpu.memory_space<vmem>>, %arg4: memref<1x128xf32, #tpu.memory_space<vmem>>, %arg5: memref<8x128xf32, #tpu.memory_space<vmem>>) attributes {dimension_semantics = [], scalar_prefetch = 0 : i64, scratch_operands = 0 : i64, tpu.core_type = #tpu.core_type<tc>} {
    %c0 = arith.constant 0 : index
    %c0_0 = arith.constant 0 : index
    %0 = vector.load %arg0[%c0, %c0_0] : memref<64x1xi32, #tpu.memory_space<vmem>>, vector<64x1xi32>
    %1 = tpu.iota {dimensions = array<i32: 1>} : vector<64x128xi32>
    %2 = vector.broadcast %0 : vector<64x1xi32> to vector<64x128xi32>
    %3 = arith.cmpi eq, %2, %1 : vector<64x128xi32>
    %4 = arith.extui %3 : vector<64x128xi1> to vector<64x128xi32>
    %5 = arith.sitofp %4 : vector<64x128xi32> to vector<64x128xf32>
    %c0_1 = arith.constant 0 : index
    %c0_2 = arith.constant 0 : index
    %6 = vector.load %arg1[%c0_1, %c0_2] : memref<128x128xf32, #tpu.memory_space<vmem>>, vector<128x128xf32>
    %cst = arith.constant dense<0.000000e+00> : vector<64x128xf32>
    %7 = tpu.matmul %5, %6, %cst {dimension_numbers = #tpu.dot_dimension_numbers<[1], [0], [0], [1], [0, 0, 1, 1], [], []>} : vector<64x128xf32>, vector<128x128xf32>, vector<64x128xf32> -> vector<64x128xf32>
    %c0_3 = arith.constant 0 : index
    %c0_4 = arith.constant 0 : index
    %8 = vector.load %arg2[%c0_3, %c0_4] : memref<128x128xf32, #tpu.memory_space<vmem>>, vector<128x128xf32>
    %9 = tpu.iota {dimensions = array<i32: 1>} : vector<8x128xi32>
    %c64_i32 = arith.constant 64 : i32
    %10 = vector.broadcast %c64_i32 : i32 to vector<8x128xi32>
    %11 = arith.cmpi sge, %9, %10 : vector<8x128xi32>
    %c96_i32 = arith.constant 96 : i32
    %12 = vector.broadcast %c96_i32 : i32 to vector<8x128xi32>
    %13 = arith.cmpi slt, %9, %12 : vector<8x128xi32>
    %14 = arith.andi %11, %13 : vector<8x128xi1>
    %cst_5 = arith.constant 0.000000e+00 : f32
    %15 = vector.broadcast %cst_5 : f32 to vector<8x128xf32>
    %cst_6 = arith.constant 0.000000e+00 : f32
    %16 = vector.broadcast %cst_6 : f32 to vector<8x128xf32>
    %17 = vector.extract_strided_slice %7 {offsets = [0, 0], sizes = [8, 128], strides = [1, 1]} : vector<64x128xf32> to vector<8x128xf32>
    %cst_7 = arith.constant dense<0.000000e+00> : vector<8x128xf32>
    %18 = tpu.matmul %15, %8, %cst_7 {dimension_numbers = #tpu.dot_dimension_numbers<[1], [0], [0], [1], [0, 0, 1, 1], [], []>} : vector<8x128xf32>, vector<128x128xf32>, vector<8x128xf32> -> vector<8x128xf32>
    %19 = arith.addf %17, %18 : vector<8x128xf32>
    %20 = math.tanh %19 : vector<8x128xf32>
    %21 = arith.negf %19 : vector<8x128xf32>
    %22 = math.exp %21 : vector<8x128xf32>
    %cst_8 = arith.constant 1.000000e+00 : f32
    %23 = vector.broadcast %cst_8 : f32 to vector<8x128xf32>
    %24 = arith.addf %23, %22 : vector<8x128xf32>
    %25 = arith.divf %23, %24 : vector<8x128xf32>
    %26 = arith.select %14, %20, %25 : vector<8x128xi1>, vector<8x128xf32>
    %c96_i32_9 = arith.constant 96 : i32
    %27 = tpu.dynamic_rotate %26 by %c96_i32_9 dim 1 : vector<8x128xf32>, i32 -> vector<8x128xf32>
    %c64_i32_10 = arith.constant 64 : i32
    %28 = tpu.dynamic_rotate %26 by %c64_i32_10 dim 1 : vector<8x128xf32>, i32 -> vector<8x128xf32>
    %c32_i32 = arith.constant 32 : i32
    %29 = tpu.dynamic_rotate %26 by %c32_i32 dim 1 : vector<8x128xf32>, i32 -> vector<8x128xf32>
    %30 = arith.mulf %27, %16 : vector<8x128xf32>
    %31 = arith.mulf %26, %28 : vector<8x128xf32>
    %32 = arith.addf %30, %31 : vector<8x128xf32>
    %33 = math.tanh %32 : vector<8x128xf32>
    %34 = arith.mulf %29, %33 : vector<8x128xf32>
    %35 = vector.extract_strided_slice %7 {offsets = [8, 0], sizes = [8, 128], strides = [1, 1]} : vector<64x128xf32> to vector<8x128xf32>
    %cst_11 = arith.constant dense<0.000000e+00> : vector<8x128xf32>
    %36 = tpu.matmul %34, %8, %cst_11 {dimension_numbers = #tpu.dot_dimension_numbers<[1], [0], [0], [1], [0, 0, 1, 1], [], []>} : vector<8x128xf32>, vector<128x128xf32>, vector<8x128xf32> -> vector<8x128xf32>
    %37 = arith.addf %35, %36 : vector<8x128xf32>
    %38 = math.tanh %37 : vector<8x128xf32>
    %39 = arith.negf %37 : vector<8x128xf32>
    %40 = math.exp %39 : vector<8x128xf32>
    %cst_12 = arith.constant 1.000000e+00 : f32
    %41 = vector.broadcast %cst_12 : f32 to vector<8x128xf32>
    %42 = arith.addf %41, %40 : vector<8x128xf32>
    %43 = arith.divf %41, %42 : vector<8x128xf32>
    %44 = arith.select %14, %38, %43 : vector<8x128xi1>, vector<8x128xf32>
    %c96_i32_13 = arith.constant 96 : i32
    %45 = tpu.dynamic_rotate %44 by %c96_i32_13 dim 1 : vector<8x128xf32>, i32 -> vector<8x128xf32>
    %c64_i32_14 = arith.constant 64 : i32
    %46 = tpu.dynamic_rotate %44 by %c64_i32_14 dim 1 : vector<8x128xf32>, i32 -> vector<8x128xf32>
    %c32_i32_15 = arith.constant 32 : i32
    %47 = tpu.dynamic_rotate %44 by %c32_i32_15 dim 1 : vector<8x128xf32>, i32 -> vector<8x128xf32>
    %48 = arith.mulf %45, %32 : vector<8x128xf32>
    %49 = arith.mulf %44, %46 : vector<8x128xf32>
    %50 = arith.addf %48, %49 : vector<8x128xf32>
    %51 = math.tanh %50 : vector<8x128xf32>
    %52 = arith.mulf %47, %51 : vector<8x128xf32>
    %53 = vector.extract_strided_slice %7 {offsets = [16, 0], sizes = [8, 128], strides = [1, 1]} : vector<64x128xf32> to vector<8x128xf32>
    %cst_16 = arith.constant dense<0.000000e+00> : vector<8x128xf32>
    %54 = tpu.matmul %52, %8, %cst_16 {dimension_numbers = #tpu.dot_dimension_numbers<[1], [0], [0], [1], [0, 0, 1, 1], [], []>} : vector<8x128xf32>, vector<128x128xf32>, vector<8x128xf32> -> vector<8x128xf32>
    %55 = arith.addf %53, %54 : vector<8x128xf32>
    %56 = math.tanh %55 : vector<8x128xf32>
    %57 = arith.negf %55 : vector<8x128xf32>
    %58 = math.exp %57 : vector<8x128xf32>
    %cst_17 = arith.constant 1.000000e+00 : f32
    %59 = vector.broadcast %cst_17 : f32 to vector<8x128xf32>
    %60 = arith.addf %59, %58 : vector<8x128xf32>
    %61 = arith.divf %59, %60 : vector<8x128xf32>
    %62 = arith.select %14, %56, %61 : vector<8x128xi1>, vector<8x128xf32>
    %c96_i32_18 = arith.constant 96 : i32
    %63 = tpu.dynamic_rotate %62 by %c96_i32_18 dim 1 : vector<8x128xf32>, i32 -> vector<8x128xf32>
    %c64_i32_19 = arith.constant 64 : i32
    %64 = tpu.dynamic_rotate %62 by %c64_i32_19 dim 1 : vector<8x128xf32>, i32 -> vector<8x128xf32>
    %c32_i32_20 = arith.constant 32 : i32
    %65 = tpu.dynamic_rotate %62 by %c32_i32_20 dim 1 : vector<8x128xf32>, i32 -> vector<8x128xf32>
    %66 = arith.mulf %63, %50 : vector<8x128xf32>
    %67 = arith.mulf %62, %64 : vector<8x128xf32>
    %68 = arith.addf %66, %67 : vector<8x128xf32>
    %69 = math.tanh %68 : vector<8x128xf32>
    %70 = arith.mulf %65, %69 : vector<8x128xf32>
    %71 = vector.extract_strided_slice %7 {offsets = [24, 0], sizes = [8, 128], strides = [1, 1]} : vector<64x128xf32> to vector<8x128xf32>
    %cst_21 = arith.constant dense<0.000000e+00> : vector<8x128xf32>
    %72 = tpu.matmul %70, %8, %cst_21 {dimension_numbers = #tpu.dot_dimension_numbers<[1], [0], [0], [1], [0, 0, 1, 1], [], []>} : vector<8x128xf32>, vector<128x128xf32>, vector<8x128xf32> -> vector<8x128xf32>
    %73 = arith.addf %71, %72 : vector<8x128xf32>
    %74 = math.tanh %73 : vector<8x128xf32>
    %75 = arith.negf %73 : vector<8x128xf32>
    %76 = math.exp %75 : vector<8x128xf32>
    %cst_22 = arith.constant 1.000000e+00 : f32
    %77 = vector.broadcast %cst_22 : f32 to vector<8x128xf32>
    %78 = arith.addf %77, %76 : vector<8x128xf32>
    %79 = arith.divf %77, %78 : vector<8x128xf32>
    %80 = arith.select %14, %74, %79 : vector<8x128xi1>, vector<8x128xf32>
    %c96_i32_23 = arith.constant 96 : i32
    %81 = tpu.dynamic_rotate %80 by %c96_i32_23 dim 1 : vector<8x128xf32>, i32 -> vector<8x128xf32>
    %c64_i32_24 = arith.constant 64 : i32
    %82 = tpu.dynamic_rotate %80 by %c64_i32_24 dim 1 : vector<8x128xf32>, i32 -> vector<8x128xf32>
    %c32_i32_25 = arith.constant 32 : i32
    %83 = tpu.dynamic_rotate %80 by %c32_i32_25 dim 1 : vector<8x128xf32>, i32 -> vector<8x128xf32>
    %84 = arith.mulf %81, %68 : vector<8x128xf32>
    %85 = arith.mulf %80, %82 : vector<8x128xf32>
    %86 = arith.addf %84, %85 : vector<8x128xf32>
    %87 = math.tanh %86 : vector<8x128xf32>
    %88 = arith.mulf %83, %87 : vector<8x128xf32>
    %89 = vector.extract_strided_slice %7 {offsets = [32, 0], sizes = [8, 128], strides = [1, 1]} : vector<64x128xf32> to vector<8x128xf32>
    %cst_26 = arith.constant dense<0.000000e+00> : vector<8x128xf32>
    %90 = tpu.matmul %88, %8, %cst_26 {dimension_numbers = #tpu.dot_dimension_numbers<[1], [0], [0], [1], [0, 0, 1, 1], [], []>} : vector<8x128xf32>, vector<128x128xf32>, vector<8x128xf32> -> vector<8x128xf32>
    %91 = arith.addf %89, %90 : vector<8x128xf32>
    %92 = math.tanh %91 : vector<8x128xf32>
    %93 = arith.negf %91 : vector<8x128xf32>
    %94 = math.exp %93 : vector<8x128xf32>
    %cst_27 = arith.constant 1.000000e+00 : f32
    %95 = vector.broadcast %cst_27 : f32 to vector<8x128xf32>
    %96 = arith.addf %95, %94 : vector<8x128xf32>
    %97 = arith.divf %95, %96 : vector<8x128xf32>
    %98 = arith.select %14, %92, %97 : vector<8x128xi1>, vector<8x128xf32>
    %c96_i32_28 = arith.constant 96 : i32
    %99 = tpu.dynamic_rotate %98 by %c96_i32_28 dim 1 : vector<8x128xf32>, i32 -> vector<8x128xf32>
    %c64_i32_29 = arith.constant 64 : i32
    %100 = tpu.dynamic_rotate %98 by %c64_i32_29 dim 1 : vector<8x128xf32>, i32 -> vector<8x128xf32>
    %c32_i32_30 = arith.constant 32 : i32
    %101 = tpu.dynamic_rotate %98 by %c32_i32_30 dim 1 : vector<8x128xf32>, i32 -> vector<8x128xf32>
    %102 = arith.mulf %99, %86 : vector<8x128xf32>
    %103 = arith.mulf %98, %100 : vector<8x128xf32>
    %104 = arith.addf %102, %103 : vector<8x128xf32>
    %105 = math.tanh %104 : vector<8x128xf32>
    %106 = arith.mulf %101, %105 : vector<8x128xf32>
    %107 = vector.extract_strided_slice %7 {offsets = [40, 0], sizes = [8, 128], strides = [1, 1]} : vector<64x128xf32> to vector<8x128xf32>
    %cst_31 = arith.constant dense<0.000000e+00> : vector<8x128xf32>
    %108 = tpu.matmul %106, %8, %cst_31 {dimension_numbers = #tpu.dot_dimension_numbers<[1], [0], [0], [1], [0, 0, 1, 1], [], []>} : vector<8x128xf32>, vector<128x128xf32>, vector<8x128xf32> -> vector<8x128xf32>
    %109 = arith.addf %107, %108 : vector<8x128xf32>
    %110 = math.tanh %109 : vector<8x128xf32>
    %111 = arith.negf %109 : vector<8x128xf32>
    %112 = math.exp %111 : vector<8x128xf32>
    %cst_32 = arith.constant 1.000000e+00 : f32
    %113 = vector.broadcast %cst_32 : f32 to vector<8x128xf32>
    %114 = arith.addf %113, %112 : vector<8x128xf32>
    %115 = arith.divf %113, %114 : vector<8x128xf32>
    %116 = arith.select %14, %110, %115 : vector<8x128xi1>, vector<8x128xf32>
    %c96_i32_33 = arith.constant 96 : i32
    %117 = tpu.dynamic_rotate %116 by %c96_i32_33 dim 1 : vector<8x128xf32>, i32 -> vector<8x128xf32>
    %c64_i32_34 = arith.constant 64 : i32
    %118 = tpu.dynamic_rotate %116 by %c64_i32_34 dim 1 : vector<8x128xf32>, i32 -> vector<8x128xf32>
    %c32_i32_35 = arith.constant 32 : i32
    %119 = tpu.dynamic_rotate %116 by %c32_i32_35 dim 1 : vector<8x128xf32>, i32 -> vector<8x128xf32>
    %120 = arith.mulf %117, %104 : vector<8x128xf32>
    %121 = arith.mulf %116, %118 : vector<8x128xf32>
    %122 = arith.addf %120, %121 : vector<8x128xf32>
    %123 = math.tanh %122 : vector<8x128xf32>
    %124 = arith.mulf %119, %123 : vector<8x128xf32>
    %125 = vector.extract_strided_slice %7 {offsets = [48, 0], sizes = [8, 128], strides = [1, 1]} : vector<64x128xf32> to vector<8x128xf32>
    %cst_36 = arith.constant dense<0.000000e+00> : vector<8x128xf32>
    %126 = tpu.matmul %124, %8, %cst_36 {dimension_numbers = #tpu.dot_dimension_numbers<[1], [0], [0], [1], [0, 0, 1, 1], [], []>} : vector<8x128xf32>, vector<128x128xf32>, vector<8x128xf32> -> vector<8x128xf32>
    %127 = arith.addf %125, %126 : vector<8x128xf32>
    %128 = math.tanh %127 : vector<8x128xf32>
    %129 = arith.negf %127 : vector<8x128xf32>
    %130 = math.exp %129 : vector<8x128xf32>
    %cst_37 = arith.constant 1.000000e+00 : f32
    %131 = vector.broadcast %cst_37 : f32 to vector<8x128xf32>
    %132 = arith.addf %131, %130 : vector<8x128xf32>
    %133 = arith.divf %131, %132 : vector<8x128xf32>
    %134 = arith.select %14, %128, %133 : vector<8x128xi1>, vector<8x128xf32>
    %c96_i32_38 = arith.constant 96 : i32
    %135 = tpu.dynamic_rotate %134 by %c96_i32_38 dim 1 : vector<8x128xf32>, i32 -> vector<8x128xf32>
    %c64_i32_39 = arith.constant 64 : i32
    %136 = tpu.dynamic_rotate %134 by %c64_i32_39 dim 1 : vector<8x128xf32>, i32 -> vector<8x128xf32>
    %c32_i32_40 = arith.constant 32 : i32
    %137 = tpu.dynamic_rotate %134 by %c32_i32_40 dim 1 : vector<8x128xf32>, i32 -> vector<8x128xf32>
    %138 = arith.mulf %135, %122 : vector<8x128xf32>
    %139 = arith.mulf %134, %136 : vector<8x128xf32>
    %140 = arith.addf %138, %139 : vector<8x128xf32>
    %141 = math.tanh %140 : vector<8x128xf32>
    %142 = arith.mulf %137, %141 : vector<8x128xf32>
    %143 = vector.extract_strided_slice %7 {offsets = [56, 0], sizes = [8, 128], strides = [1, 1]} : vector<64x128xf32> to vector<8x128xf32>
    %cst_41 = arith.constant dense<0.000000e+00> : vector<8x128xf32>
    %144 = tpu.matmul %142, %8, %cst_41 {dimension_numbers = #tpu.dot_dimension_numbers<[1], [0], [0], [1], [0, 0, 1, 1], [], []>} : vector<8x128xf32>, vector<128x128xf32>, vector<8x128xf32> -> vector<8x128xf32>
    %145 = arith.addf %143, %144 : vector<8x128xf32>
    %146 = math.tanh %145 : vector<8x128xf32>
    %147 = arith.negf %145 : vector<8x128xf32>
    %148 = math.exp %147 : vector<8x128xf32>
    %cst_42 = arith.constant 1.000000e+00 : f32
    %149 = vector.broadcast %cst_42 : f32 to vector<8x128xf32>
    %150 = arith.addf %149, %148 : vector<8x128xf32>
    %151 = arith.divf %149, %150 : vector<8x128xf32>
    %152 = arith.select %14, %146, %151 : vector<8x128xi1>, vector<8x128xf32>
    %c96_i32_43 = arith.constant 96 : i32
    %153 = tpu.dynamic_rotate %152 by %c96_i32_43 dim 1 : vector<8x128xf32>, i32 -> vector<8x128xf32>
    %c64_i32_44 = arith.constant 64 : i32
    %154 = tpu.dynamic_rotate %152 by %c64_i32_44 dim 1 : vector<8x128xf32>, i32 -> vector<8x128xf32>
    %c32_i32_45 = arith.constant 32 : i32
    %155 = tpu.dynamic_rotate %152 by %c32_i32_45 dim 1 : vector<8x128xf32>, i32 -> vector<8x128xf32>
    %156 = arith.mulf %153, %140 : vector<8x128xf32>
    %157 = arith.mulf %152, %154 : vector<8x128xf32>
    %158 = arith.addf %156, %157 : vector<8x128xf32>
    %159 = math.tanh %158 : vector<8x128xf32>
    %160 = arith.mulf %155, %159 : vector<8x128xf32>
    %c0_46 = arith.constant 0 : index
    %c0_47 = arith.constant 0 : index
    %161 = vector.load %arg3[%c0_46, %c0_47] : memref<128x128xf32, #tpu.memory_space<vmem>>, vector<128x128xf32>
    %cst_48 = arith.constant dense<0.000000e+00> : vector<8x128xf32>
    %162 = tpu.matmul %160, %161, %cst_48 {dimension_numbers = #tpu.dot_dimension_numbers<[1], [0], [0], [1], [0, 0, 1, 1], [], []>} : vector<8x128xf32>, vector<128x128xf32>, vector<8x128xf32> -> vector<8x128xf32>
    %c0_49 = arith.constant 0 : index
    %c0_50 = arith.constant 0 : index
    %163 = vector.load %arg4[%c0_49, %c0_50] : memref<1x128xf32, #tpu.memory_space<vmem>>, vector<1x128xf32>
    %164 = vector.broadcast %163 : vector<1x128xf32> to vector<8x128xf32>
    %165 = arith.addf %162, %164 : vector<8x128xf32>
    %c0_51 = arith.constant 0 : index
    %c0_52 = arith.constant 0 : index
    %166 = vector.load %arg5[%c0_51, %c0_52] : memref<8x128xf32, #tpu.memory_space<vmem>>, vector<8x128xf32>
    tpu.vector_store %arg5[%c0_51, %c0_52], %165 {strides = array<i32>} : memref<8x128xf32, #tpu.memory_space<vmem>>, vector<8x128xf32>,
    return
  }
}

</mosaic_0001>

<llo_original>
// kernel: rnn_model_forward.1
$region0: #{rnn_model_forward.1}
  #allocation0 [shape = 'u32[]', space=smem, size = 0x4, offset = 0x4, fixed_abs, tag = 'smem constant byte address 0x4 - core index']
  #allocation1 [shape = 'u32[144,128]{1,0:T(1,128)}', space=vmem, size = 0x12000, scoped, tag = 'internal scratch']
  %s0 = inlined_call_operand.vmem [shape: s32[64,1], index: 0, kind: input, shape index: {}]
  %s1 = inlined_call_operand.hbm [shape: f32[128,128], index: 1, kind: input, shape index: {}]
  %s2 = inlined_call_operand.hbm [shape: f32[128,128], index: 2, kind: input, shape index: {}]
  %s3 = inlined_call_operand.hbm [shape: f32[128,128], index: 3, kind: input, shape index: {}]
  %s4 = inlined_call_operand.vmem [shape: f32[1,128], index: 4, kind: input, shape index: {}]
  %s5 = inlined_call_operand.vmem [shape: f32[8,128], index: 5, kind: output, shape index: {}]
  %s6 = sld [smem:[#allocation0]]
  $region42: #{rnn_model_forward.1} parent=0
    _
  %s8 = ssub.s32 1, %s6
  %s9 = scalar_select 0, %s8, %s6
  $region1: #{rnn_model_forward.1} parent=0
    #allocation2 [shape = 'u8[65536]{0}', space=vmem, size = 0x10000, scoped, tag = 'input window, operand 1, single buffered']
    #allocation3 [shape = 's32[1]{0}', space=sflag, size = 0x4, scoped, tag = 'scoped memory for rnn_model_forward.1']
    #allocation4 [shape = 'u8[65536]{0}', space=vmem, size = 0x10000, scoped, tag = 'input window, operand 2, single buffered']
    #allocation5 [shape = 's32[1]{0}', space=sflag, size = 0x4, scoped, tag = 'scoped memory for rnn_model_forward.1']
    #allocation6 [shape = 'u8[65536]{0}', space=vmem, size = 0x10000, scoped, tag = 'input window, operand 3, single buffered']
    %10 = vsyncpa [#allocation3], 0
    %11 = vsyncpa [#allocation5], 0
    // Predicated region
    $region2: #{rnn_model_forward.1} parent=1 // pred_check
      _
    $region3: #{rnn_model_forward.1} parent=1 // pred_check_branch
      %13 = sbr.rel (0) target = $region5
    $region4: #{rnn_model_forward.1} parent=1 // pred_region
      _
    $region5: #{rnn_model_forward.1} parent=1 // pred_fallthru
      _
    // Predicated region
    $region6: #{rnn_model_forward.1} parent=1 // pred_check
      _
    $region7: #{rnn_model_forward.1} parent=1 // pred_check_branch
      %15 = sbr.rel (0) target = $region9
    $region8: #{rnn_model_forward.1} parent=1 // pred_region
      %s17 = ssub.s32 2048, 2048
      %18 = vsyncadd [#allocation3], %s17
      %s19 = sshll.u32 [#allocation2], 4
      %s20 = int_to_ptr.vmem [resolvable:$true] %s19
      %25 = dma.hbm_to_vmem [thread:$0]  %s1, 2048, %s20, [#allocation3], 128, 128, 8
    $region9: #{rnn_model_forward.1} parent=1 // pred_fallthru
      _
    // Predicated region
    $region10: #{rnn_model_forward.1} parent=1 // pred_check
      _
    $region11: #{rnn_model_forward.1} parent=1 // pred_check_branch
      %27 = sbr.rel (0) target = $region13
    $region12: #{rnn_model_forward.1} parent=1 // pred_region
      %s29 = ssub.s32 2048, 2048
      %30 = vsyncadd [#allocation5], %s29
      %s31 = sshll.u32 [#allocation4], 4
      %s32 = int_to_ptr.vmem [resolvable:$true] %s31
      %37 = dma.hbm_to_vmem [thread:$0]  %s2, 2048, %s32, [#allocation5], 128, 128, 8
    $region13: #{rnn_model_forward.1} parent=1 // pred_fallthru
      _
    // Predicated region
    $region14: #{rnn_model_forward.1} parent=1 // pred_check
      _
    $region15: #{rnn_model_forward.1} parent=1 // pred_check_branch
      %39 = sbr.rel (0) target = $region17
    $region16: #{rnn_model_forward.1} parent=1 // pred_region
      %s41 = ssub.s32 2048, 2048
      %42 = vsyncadd [#allocation5], %s41
      %s43 = sshll.u32 [#allocation6], 4
      %s44 = int_to_ptr.vmem [resolvable:$true] %s43
      %49 = dma.hbm_to_vmem [thread:$0]  %s3, 2048, %s44, [#allocation5], 128, 128, 8
    $region17: #{rnn_model_forward.1} parent=1 // pred_fallthru
      _
    // Predicated region
    $region18: #{rnn_model_forward.1} parent=1 // pred_check
      _
    $region19: #{rnn_model_forward.1} parent=1 // pred_check_branch
      %51 = sbr.rel (0) target = $region21
    $region20: #{rnn_model_forward.1} parent=1 // pred_region
      _
    $region21: #{rnn_model_forward.1} parent=1 // pred_fallthru
      _
    // Predicated region
    $region22: #{rnn_model_forward.1} parent=1 // pred_check
      _
    $region23: #{rnn_model_forward.1} parent=1 // pred_check_branch
      %53 = sbr.rel (0) target = $region25
    $region24: #{rnn_model_forward.1} parent=1 // pred_region
      %54 = dma.done [#allocation3], 2048
    $region25: #{rnn_model_forward.1} parent=1 // pred_fallthru
      _
    // Predicated region
    $region26: #{rnn_model_forward.1} parent=1 // pred_check
      _
    $region27: #{rnn_model_forward.1} parent=1 // pred_check_branch
      %56 = sbr.rel (0) target = $region29
    $region28: #{rnn_model_forward.1} parent=1 // pred_region
      %57 = dma.done [#allocation5], 2048
    $region29: #{rnn_model_forward.1} parent=1 // pred_fallthru
      _
    // Predicated region
    $region30: #{rnn_model_forward.1} parent=1 // pred_check
      _
    $region31: #{rnn_model_forward.1} parent=1 // pred_check_branch
      %59 = sbr.rel (0) target = $region33
    $region32: #{rnn_model_forward.1} parent=1 // pred_region
      %60 = dma.done [#allocation5], 2048
    $region33: #{rnn_model_forward.1} parent=1 // pred_fallthru
      _
    %v61 = vld [vmem:[%s0] sm:$0xff]
    %v62 = vld [vmem:[%s0 + $0x8] sm:$0xff]
    %v63 = vld [vmem:[%s0 + $0x10] sm:$0xff]
    %v64 = vld [vmem:[%s0 + $0x18] sm:$0xff]
    %v65 = vld [vmem:[%s0 + $0x20] sm:$0xff]
    %v66 = vld [vmem:[%s0 + $0x28] sm:$0xff]
    %v67 = vld [vmem:[%s0 + $0x30] sm:$0xff]
    %v68 = vld [vmem:[%s0 + $0x38] sm:$0xff]
    %v69 = vlaneseq
    %v70 = vand.u32 %v69, 127
    %71 = vset.pattern.permute.xlu0 0
    %72 = vperm.xlu0 %71, %v61
    %v73 = vpop.permute.xlu0 %72
    %74 = vset.pattern.permute.xlu0 0
    %75 = vperm.xlu0 %74, %v62
    %v76 = vpop.permute.xlu0 %75
    %77 = vset.pattern.permute.xlu0 0
    %78 = vperm.xlu0 %77, %v63
    %v79 = vpop.permute.xlu0 %78
    %80 = vset.pattern.permute.xlu0 0
    %81 = vperm.xlu0 %80, %v64
    %v82 = vpop.permute.xlu0 %81
    %83 = vset.pattern.permute.xlu0 0
    %84 = vperm.xlu0 %83, %v65
    %v85 = vpop.permute.xlu0 %84
    %86 = vset.pattern.permute.xlu0 0
    %87 = vperm.xlu0 %86, %v66
    %v88 = vpop.permute.xlu0 %87
    %89 = vset.pattern.permute.xlu0 0
    %90 = vperm.xlu0 %89, %v67
    %v91 = vpop.permute.xlu0 %90
    %92 = vset.pattern.permute.xlu0 0
    %93 = vperm.xlu0 %92, %v68
    %v94 = vpop.permute.xlu0 %93
    %vm95 = vcmp.eq.s32.totalorder %v73, %v70
    %vm96 = vcmp.eq.s32.totalorder %v76, %v70
    %vm97 = vcmp.eq.s32.totalorder %v79, %v70
    %vm98 = vcmp.eq.s32.totalorder %v82, %v70
    %vm99 = vcmp.eq.s32.totalorder %v85, %v70
    %vm100 = vcmp.eq.s32.totalorder %v88, %v70
    %vm101 = vcmp.eq.s32.totalorder %v91, %v70
    %vm102 = vcmp.eq.s32.totalorder %v94, %v70
    %v103 = vsel %vm95, 1, 0
    %v104 = vsel %vm96, 1, 0
    %v105 = vsel %vm97, 1, 0
    %v106 = vsel %vm98, 1, 0
    %v107 = vsel %vm99, 1, 0
    %v108 = vsel %vm100, 1, 0
    %v109 = vsel %vm101, 1, 0
    %v110 = vsel %vm102, 1, 0
    %v111 = vcvt.s32.f32 %v103
    %v112 = vcvt.s32.f32 %v104
    %v113 = vcvt.s32.f32 %v105
    %v114 = vcvt.s32.f32 %v106
    %v115 = vcvt.s32.f32 %v107
    %v116 = vcvt.s32.f32 %v108
    %v117 = vcvt.s32.f32 %v109
    %v118 = vcvt.s32.f32 %v110
    %v119 = vld [vmem:[#allocation2] sm:$0xff]
    %v120 = vld [vmem:[#allocation2 + $0x8] sm:$0xff]
    %v121 = vld [vmem:[#allocation2 + $0x10] sm:$0xff]
    %v122 = vld [vmem:[#allocation2 + $0x18] sm:$0xff]
    %v123 = vld [vmem:[#allocation2 + $0x20] sm:$0xff]
    %v124 = vld [vmem:[#allocation2 + $0x28] sm:$0xff]
    %v125 = vld [vmem:[#allocation2 + $0x30] sm:$0xff]
    %v126 = vld [vmem:[#allocation2 + $0x38] sm:$0xff]
    %v127 = vld [vmem:[#allocation2 + $0x40] sm:$0xff]
    %v128 = vld [vmem:[#allocation2 + $0x48] sm:$0xff]
    %v129 = vld [vmem:[#allocation2 + $0x50] sm:$0xff]
    %v130 = vld [vmem:[#allocation2 + $0x58] sm:$0xff]
    %v131 = vld [vmem:[#allocation2 + $0x60] sm:$0xff]
    %v132 = vld [vmem:[#allocation2 + $0x68] sm:$0xff]
    %v133 = vld [vmem:[#allocation2 + $0x70] sm:$0xff]
    %v134 = vld [vmem:[#allocation2 + $0x78] sm:$0xff]
    %135 = vmatprep.subr.mxu0 0.0
    %136 = vmatpush1.msra.mxu0 %v119
    %137 = vmatprep.subr.mxu0 0.0
    %138 = vmatpush1.msra.mxu0 %v120
    %139 = vmatprep.subr.mxu0 0.0
    %140 = vmatpush1.msra.mxu0 %v121
    %141 = vmatprep.subr.mxu0 0.0
    %142 = vmatpush1.msra.mxu0 %v122
    %143 = vmatprep.subr.mxu0 0.0
    %144 = vmatpush1.msra.mxu0 %v123
    %145 = vmatprep.subr.mxu0 0.0
    %146 = vmatpush1.msra.mxu0 %v124
    %147 = vmatprep.subr.mxu0 0.0
    %148 = vmatpush1.msra.mxu0 %v125
    %149 = vmatprep.subr.mxu0 0.0
    %150 = vmatpush1.msra.mxu0 %v126
    %151 = vmatprep.subr.mxu0 0.0
    %152 = vmatpush1.msra.mxu0 %v127
    %153 = vmatprep.subr.mxu0 0.0
    %154 = vmatpush1.msra.mxu0 %v128
    %155 = vmatprep.subr.mxu0 0.0
    %156 = vmatpush1.msra.mxu0 %v129
    %157 = vmatprep.subr.mxu0 0.0
    %158 = vmatpush1.msra.mxu0 %v130
    %159 = vmatprep.subr.mxu0 0.0
    %160 = vmatpush1.msra.mxu0 %v131
    %161 = vmatprep.subr.mxu0 0.0
    %162 = vmatpush1.msra.mxu0 %v132
    %163 = vmatprep.subr.mxu0 0.0
    %164 = vmatpush1.msra.mxu0 %v133
    %165 = vmatprep.subr.mxu0 0.0
    %166 = vmatpush1.msra.mxu0 %v134
    %167 = vmatprep.subr.mxu0 0.0
    %168 = vmatpush1.msra.mxu0 0.0
    %169 = vmatprep.subr.mxu0 0.0
    %170 = vmatpush1.msra.mxu0 0.0
    %171 = vmatprep.subr.mxu0 0.0
    %172 = vmatpush1.msra.mxu0 0.0
    %173 = vmatprep.subr.mxu0 0.0
    %174 = vmatpush1.msra.mxu0 0.0
    %175 = vmatprep.subr.mxu0 0.0
    %176 = vmatpush1.msra.mxu0 0.0
    %177 = vmatprep.subr.mxu0 0.0
    %178 = vmatpush1.msra.mxu0 0.0
    %179 = vmatprep.subr.mxu0 0.0
    %180 = vmatpush1.msra.mxu0 0.0
    %181 = vmatprep.subr.mxu0 0.0
    %182 = vmatpush1.msra.mxu0 0.0
    %183 = vmatprep.subr.mxu0 0.0
    %184 = vmatpush1.msra.mxu0 0.0
    %185 = vmatprep.subr.mxu0 0.0
    %186 = vmatpush1.msra.mxu0 0.0
    %187 = vmatprep.subr.mxu0 0.0
    %188 = vmatpush1.msra.mxu0 0.0
    %189 = vmatprep.subr.mxu0 0.0
    %190 = vmatpush1.msra.mxu0 0.0
    %191 = vmatprep.subr.mxu0 0.0
    %192 = vmatpush1.msra.mxu0 0.0
    %193 = vmatprep.subr.mxu0 0.0
    %194 = vmatpush1.msra.mxu0 0.0
    %195 = vmatprep.subr.mxu0 0.0
    %196 = vmatpush1.msra.mxu0 0.0
    %197 = vmatprep.subr.mxu0 0.0
    %198 = vmatpush1.msra.mxu0 0.0
    %199 = vmatprep.mubr.f32.mxu0 0.0
    %200 = vmatmul.mubr.f32.gmra.mrb[0].mxu0 %v111
    %v201 = vpop.f32.mrb[0].mxu0
    %v202 = vadd.f32 0.0, %v201
    %v203 = vpop.f32.mrb[0].mxu0
    %204 = vmatprep.mubr.f32.mxu0 0.0
    %205 = vmatmul.mubr.f32.gmra.mrb[0].mxu0 %v112
    %v206 = vpop.f32.mrb[0].mxu0
    %v207 = vadd.f32 0.0, %v206
    %v208 = vpop.f32.mrb[0].mxu0
    %209 = vmatprep.mubr.f32.mxu0 0.0
    %210 = vmatmul.mubr.f32.gmra.mrb[0].mxu0 %v113
    %v211 = vpop.f32.mrb[0].mxu0
    %v212 = vadd.f32 0.0, %v211
    %v213 = vpop.f32.mrb[0].mxu0
    %214 = vmatprep.mubr.f32.mxu0 0.0
    %215 = vmatmul.mubr.f32.gmra.mrb[0].mxu0 %v114
    %v216 = vpop.f32.mrb[0].mxu0
    %v217 = vadd.f32 0.0, %v216
    %v218 = vpop.f32.mrb[0].mxu0
    %219 = vmatprep.mubr.f32.mxu0 0.0
    %220 = vmatmul.mubr.f32.gmra.mrb[0].mxu0 %v115
    %v221 = vpop.f32.mrb[0].mxu0
    %v222 = vadd.f32 0.0, %v221
    %v223 = vpop.f32.mrb[0].mxu0
    %224 = vmatprep.mubr.f32.mxu0 0.0
    %225 = vmatmul.mubr.f32.gmra.mrb[0].mxu0 %v116
    %v226 = vpop.f32.mrb[0].mxu0
    %v227 = vadd.f32 0.0, %v226
    %v228 = vpop.f32.mrb[0].mxu0
    %229 = vmatprep.mubr.f32.mxu0 0.0
    %230 = vmatmul.mubr.f32.gmra.mrb[0].mxu0 %v117
    %v231 = vpop.f32.mrb[0].mxu0
    %v232 = vadd.f32 0.0, %v231
    %v233 = vpop.f32.mrb[0].mxu0
    %234 = vmatprep.mubr.f32.mxu0 0.0
    %235 = vmatmul.mubr.f32.gmra.mrb[0].mxu0 %v118
    %v236 = vpop.f32.mrb[0].mxu0
    %v237 = vadd.f32 0.0, %v236
    %v238 = vpop.f32.mrb[0].mxu0
    %239 = vdwg.mxu0
    %v240 = vld [vmem:[#allocation4] sm:$0xff]
    %v241 = vld [vmem:[#allocation4 + $0x8] sm:$0xff]
    %v242 = vld [vmem:[#allocation4 + $0x10] sm:$0xff]
    %v243 = vld [vmem:[#allocation4 + $0x18] sm:$0xff]
    %v244 = vld [vmem:[#allocation4 + $0x20] sm:$0xff]
    %v245 = vld [vmem:[#allocation4 + $0x28] sm:$0xff]
    %v246 = vld [vmem:[#allocation4 + $0x30] sm:$0xff]
    %v247 = vld [vmem:[#allocation4 + $0x38] sm:$0xff]
    %v248 = vld [vmem:[#allocation4 + $0x40] sm:$0xff]
    %v249 = vld [vmem:[#allocation4 + $0x48] sm:$0xff]
    %v250 = vld [vmem:[#allocation4 + $0x50] sm:$0xff]
    %v251 = vld [vmem:[#allocation4 + $0x58] sm:$0xff]
    %v252 = vld [vmem:[#allocation4 + $0x60] sm:$0xff]
    %v253 = vld [vmem:[#allocation4 + $0x68] sm:$0xff]
    %v254 = vld [vmem:[#allocation4 + $0x70] sm:$0xff]
    %v255 = vld [vmem:[#allocation4 + $0x78] sm:$0xff]
    %vm256 = vcmp.ge.s32.totalorder %v70, 64
    %vm257 = vcmp.lt.s32.totalorder %v70, 96
    %vm258 = vmand %vm256, %vm257
    %259 = vmatprep.subr.mxu0 0.0
    %260 = vmatpush1.msra.mxu0 %v240
    %261 = vmatprep.subr.mxu0 0.0
    %262 = vmatpush1.msra.mxu0 %v241
    %263 = vmatprep.subr.mxu0 0.0
    %264 = vmatpush1.msra.mxu0 %v242
    %265 = vmatprep.subr.mxu0 0.0
    %266 = vmatpush1.msra.mxu0 %v243
    %267 = vmatprep.subr.mxu0 0.0
    %268 = vmatpush1.msra.mxu0 %v244
    %269 = vmatprep.subr.mxu0 0.0
    %270 = vmatpush1.msra.mxu0 %v245
    %271 = vmatprep.subr.mxu0 0.0
    %272 = vmatpush1.msra.mxu0 %v246
    %273 = vmatprep.subr.mxu0 0.0
    %274 = vmatpush1.msra.mxu0 %v247
    %275 = vmatprep.subr.mxu0 0.0
    %276 = vmatpush1.msra.mxu0 %v248
    %277 = vmatprep.subr.mxu0 0.0
    %278 = vmatpush1.msra.mxu0 %v249
    %279 = vmatprep.subr.mxu0 0.0
    %280 = vmatpush1.msra.mxu0 %v250
    %281 = vmatprep.subr.mxu0 0.0
    %282 = vmatpush1.msra.mxu0 %v251
    %283 = vmatprep.subr.mxu0 0.0
    %284 = vmatpush1.msra.mxu0 %v252
    %285 = vmatprep.subr.mxu0 0.0
    %286 = vmatpush1.msra.mxu0 %v253
    %287 = vmatprep.subr.mxu0 0.0
    %288 = vmatpush1.msra.mxu0 %v254
    %289 = vmatprep.subr.mxu0 0.0
    %290 = vmatpush1.msra.mxu0 %v255
    %291 = vmatprep.subr.mxu0 0.0
    %292 = vmatpush1.msra.mxu0 0.0
    %293 = vmatprep.subr.mxu0 0.0
    %294 = vmatpush1.msra.mxu0 0.0
    %295 = vmatprep.subr.mxu0 0.0
    %296 = vmatpush1.msra.mxu0 0.0
    %297 = vmatprep.subr.mxu0 0.0
    %298 = vmatpush1.msra.mxu0 0.0
    %299 = vmatprep.subr.mxu0 0.0
    %300 = vmatpush1.msra.mxu0 0.0
    %301 = vmatprep.subr.mxu0 0.0
    %302 = vmatpush1.msra.mxu0 0.0
    %303 = vmatprep.subr.mxu0 0.0
    %304 = vmatpush1.msra.mxu0 0.0
    %305 = vmatprep.subr.mxu0 0.0
    %306 = vmatpush1.msra.mxu0 0.0
    %307 = vmatprep.subr.mxu0 0.0
    %308 = vmatpush1.msra.mxu0 0.0
    %309 = vmatprep.subr.mxu0 0.0
    %310 = vmatpush1.msra.mxu0 0.0
    %311 = vmatprep.subr.mxu0 0.0
    %312 = vmatpush1.msra.mxu0 0.0
    %313 = vmatprep.subr.mxu0 0.0
    %314 = vmatpush1.msra.mxu0 0.0
    %315 = vmatprep.subr.mxu0 0.0
    %316 = vmatpush1.msra.mxu0 0.0
    %317 = vmatprep.subr.mxu0 0.0
    %318 = vmatpush1.msra.mxu0 0.0
    %319 = vmatprep.subr.mxu0 0.0
    %320 = vmatpush1.msra.mxu0 0.0
    %321 = vmatprep.subr.mxu0 0.0
    %322 = vmatpush1.msra.mxu0 0.0
    %323 = vmatprep.mubr.f32.mxu0 0.0
    %324 = vmatmul.mubr.f32.gmra.mrb[0].mxu0 0.0
    %v325 = vpop.f32.mrb[0].mxu0
    %v326 = vadd.f32 0.0, %v325
    %v327 = vpop.f32.mrb[0].mxu0
    %328 = vdwg.mxu0
    %v329 = vadd.f32 %v202, %v326
    %v330 = vtanh.pop %v329
    %v331 = vxor.u32 %v329, 2147483648
    %v332 = vmul.f32 %v331, 1.442695
    %v333 = vpow.pop %v332
    %v334 = vadd.f32 %v333, 1.0
    %v335 = vrcp.pop %v334
    %v336 = vmul.f32 1.0, %v335
    %v337 = vsel %vm258, %v330, %v336
    %338 = vrot.lane.b32.xlu0 %v337, 96
    %v339 = vpop.permute.xlu0 %338
    %340 = vrot.lane.b32.xlu0 %v337, 64
    %v341 = vpop.permute.xlu0 %340
    %342 = vrot.lane.b32.xlu0 %v337, 32
    %v343 = vpop.permute.xlu0 %342
    %v344 = vmul.f32 %v339, 0.0
    %v345 = vmul.f32 %v337, %v341
    %v346 = vadd.f32 %v344, %v345
    %v347 = vtanh.pop %v346
    %v348 = vmul.f32 %v343, %v347
    %349 = vmatprep.subr.mxu0 0.0
    %350 = vmatpush1.msra.mxu0 %v240
    %351 = vmatprep.subr.mxu0 0.0
    %352 = vmatpush1.msra.mxu0 %v241
    %353 = vmatprep.subr.mxu0 0.0
    %354 = vmatpush1.msra.mxu0 %v242
    %355 = vmatprep.subr.mxu0 0.0
    %356 = vmatpush1.msra.mxu0 %v243
    %357 = vmatprep.subr.mxu0 0.0
    %358 = vmatpush1.msra.mxu0 %v244
    %359 = vmatprep.subr.mxu0 0.0
    %360 = vmatpush1.msra.mxu0 %v245
    %361 = vmatprep.subr.mxu0 0.0
    %362 = vmatpush1.msra.mxu0 %v246
    %363 = vmatprep.subr.mxu0 0.0
    %364 = vmatpush1.msra.mxu0 %v247
    %365 = vmatprep.subr.mxu0 0.0
    %366 = vmatpush1.msra.mxu0 %v248
    %367 = vmatprep.subr.mxu0 0.0
    %368 = vmatpush1.msra.mxu0 %v249
    %369 = vmatprep.subr.mxu0 0.0
    %370 = vmatpush1.msra.mxu0 %v250
    %371 = vmatprep.subr.mxu0 0.0
    %372 = vmatpush1.msra.mxu0 %v251
    %373 = vmatprep.subr.mxu0 0.0
    %374 = vmatpush1.msra.mxu0 %v252
    %375 = vmatprep.subr.mxu0 0.0
    %376 = vmatpush1.msra.mxu0 %v253
    %377 = vmatprep.subr.mxu0 0.0
    %378 = vmatpush1.msra.mxu0 %v254
    %379 = vmatprep.subr.mxu0 0.0
    %380 = vmatpush1.msra.mxu0 %v255
    %381 = vmatprep.subr.mxu0 0.0
    %382 = vmatpush1.msra.mxu0 0.0
    %383 = vmatprep.subr.mxu0 0.0
    %384 = vmatpush1.msra.mxu0 0.0
    %385 = vmatprep.subr.mxu0 0.0
    %386 = vmatpush1.msra.mxu0 0.0
    %387 = vmatprep.subr.mxu0 0.0
    %388 = vmatpush1.msra.mxu0 0.0
    %389 = vmatprep.subr.mxu0 0.0
    %390 = vmatpush1.msra.mxu0 0.0
    %391 = vmatprep.subr.mxu0 0.0
    %392 = vmatpush1.msra.mxu0 0.0
    %393 = vmatprep.subr.mxu0 0.0
    %394 = vmatpush1.msra.mxu0 0.0
    %395 = vmatprep.subr.mxu0 0.0
    %396 = vmatpush1.msra.mxu0 0.0
    %397 = vmatprep.subr.mxu0 0.0
    %398 = vmatpush1.msra.mxu0 0.0
    %399 = vmatprep.subr.mxu0 0.0
    %400 = vmatpush1.msra.mxu0 0.0
    %401 = vmatprep.subr.mxu0 0.0
    %402 = vmatpush1.msra.mxu0 0.0
    %403 = vmatprep.subr.mxu0 0.0
    %404 = vmatpush1.msra.mxu0 0.0
    %405 = vmatprep.subr.mxu0 0.0
    %406 = vmatpush1.msra.mxu0 0.0
    %407 = vmatprep.subr.mxu0 0.0
    %408 = vmatpush1.msra.mxu0 0.0
    %409 = vmatprep.subr.mxu0 0.0
    %410 = vmatpush1.msra.mxu0 0.0
    %411 = vmatprep.subr.mxu0 0.0
    %412 = vmatpush1.msra.mxu0 0.0
    %413 = vmatprep.mubr.f32.mxu0 0.0
    %414 = vmatmul.mubr.f32.gmra.mrb[0].mxu0 %v348
    %v415 = vpop.f32.mrb[0].mxu0
    %v416 = vadd.f32 0.0, %v415
    %v417 = vpop.f32.mrb[0].mxu0
    %418 = vdwg.mxu0
    %v419 = vadd.f32 %v207, %v416
    %v420 = vtanh.pop %v419
    %v421 = vxor.u32 %v419, 2147483648
    %v422 = vmul.f32 %v421, 1.442695
    %v423 = vpow.pop %v422
    %v424 = vadd.f32 %v423, 1.0
    %v425 = vrcp.pop %v424
    %v426 = vmul.f32 1.0, %v425
    %v427 = vsel %vm258, %v420, %v426
    %428 = vrot.lane.b32.xlu0 %v427, 96
    %v429 = vpop.permute.xlu0 %428
    %430 = vrot.lane.b32.xlu0 %v427, 64
    %v431 = vpop.permute.xlu0 %430
    %432 = vrot.lane.b32.xlu0 %v427, 32
    %v433 = vpop.permute.xlu0 %432
    %v434 = vmul.f32 %v429, %v346
    %v435 = vmul.f32 %v427, %v431
    %v436 = vadd.f32 %v434, %v435
    %v437 = vtanh.pop %v436
    %v438 = vmul.f32 %v433, %v437
    %439 = vmatprep.subr.mxu0 0.0
    %440 = vmatpush1.msra.mxu0 %v240
    %441 = vmatprep.subr.mxu0 0.0
    %442 = vmatpush1.msra.mxu0 %v241
    %443 = vmatprep.subr.mxu0 0.0
    %444 = vmatpush1.msra.mxu0 %v242
    %445 = vmatprep.subr.mxu0 0.0
    %446 = vmatpush1.msra.mxu0 %v243
    %447 = vmatprep.subr.mxu0 0.0
    %448 = vmatpush1.msra.mxu0 %v244
    %449 = vmatprep.subr.mxu0 0.0
    %450 = vmatpush1.msra.mxu0 %v245
    %451 = vmatprep.subr.mxu0 0.0
    %452 = vmatpush1.msra.mxu0 %v246
    %453 = vmatprep.subr.mxu0 0.0
    %454 = vmatpush1.msra.mxu0 %v247
    %455 = vmatprep.subr.mxu0 0.0
    %456 = vmatpush1.msra.mxu0 %v248
    %457 = vmatprep.subr.mxu0 0.0
    %458 = vmatpush1.msra.mxu0 %v249
    %459 = vmatprep.subr.mxu0 0.0
    %460 = vmatpush1.msra.mxu0 %v250
    %461 = vmatprep.subr.mxu0 0.0
    %462 = vmatpush1.msra.mxu0 %v251
    %463 = vmatprep.subr.mxu0 0.0
    %464 = vmatpush1.msra.mxu0 %v252
    %465 = vmatprep.subr.mxu0 0.0
    %466 = vmatpush1.msra.mxu0 %v253
    %467 = vmatprep.subr.mxu0 0.0
    %468 = vmatpush1.msra.mxu0 %v254
    %469 = vmatprep.subr.mxu0 0.0
    %470 = vmatpush1.msra.mxu0 %v255
    %471 = vmatprep.subr.mxu0 0.0
    %472 = vmatpush1.msra.mxu0 0.0
    %473 = vmatprep.subr.mxu0 0.0
    %474 = vmatpush1.msra.mxu0 0.0
    %475 = vmatprep.subr.mxu0 0.0
    %476 = vmatpush1.msra.mxu0 0.0
    %477 = vmatprep.subr.mxu0 0.0
    %478 = vmatpush1.msra.mxu0 0.0
    %479 = vmatprep.subr.mxu0 0.0
    %480 = vmatpush1.msra.mxu0 0.0
    %481 = vmatprep.subr.mxu0 0.0
    %482 = vmatpush1.msra.mxu0 0.0
    %483 = vmatprep.subr.mxu0 0.0
    %484 = vmatpush1.msra.mxu0 0.0
    %485 = vmatprep.subr.mxu0 0.0
    %486 = vmatpush1.msra.mxu0 0.0
    %487 = vmatprep.subr.mxu0 0.0
    %488 = vmatpush1.msra.mxu0 0.0
    %489 = vmatprep.subr.mxu0 0.0
    %490 = vmatpush1.msra.mxu0 0.0
    %491 = vmatprep.subr.mxu0 0.0
    %492 = vmatpush1.msra.mxu0 0.0
    %493 = vmatprep.subr.mxu0 0.0
    %494 = vmatpush1.msra.mxu0 0.0
    %495 = vmatprep.subr.mxu0 0.0
    %496 = vmatpush1.msra.mxu0 0.0
    %497 = vmatprep.subr.mxu0 0.0
    %498 = vmatpush1.msra.mxu0 0.0
    %499 = vmatprep.subr.mxu0 0.0
    %500 = vmatpush1.msra.mxu0 0.0
    %501 = vmatprep.subr.mxu0 0.0
    %502 = vmatpush1.msra.mxu0 0.0
    %503 = vmatprep.mubr.f32.mxu0 0.0
    %504 = vmatmul.mubr.f32.gmra.mrb[0].mxu0 %v438
    %v505 = vpop.f32.mrb[0].mxu0
    %v506 = vadd.f32 0.0, %v505
    %v507 = vpop.f32.mrb[0].mxu0
    %508 = vdwg.mxu0
    %v509 = vadd.f32 %v212, %v506
    %v510 = vtanh.pop %v509
    %v511 = vxor.u32 %v509, 2147483648
    %v512 = vmul.f32 %v511, 1.442695
    %v513 = vpow.pop %v512
    %v514 = vadd.f32 %v513, 1.0
    %v515 = vrcp.pop %v514
    %v516 = vmul.f32 1.0, %v515
    %v517 = vsel %vm258, %v510, %v516
    %518 = vrot.lane.b32.xlu0 %v517, 96
    %v519 = vpop.permute.xlu0 %518
    %520 = vrot.lane.b32.xlu0 %v517, 64
    %v521 = vpop.permute.xlu0 %520
    %522 = vrot.lane.b32.xlu0 %v517, 32
    %v523 = vpop.permute.xlu0 %522
    %v524 = vmul.f32 %v519, %v436
    %v525 = vmul.f32 %v517, %v521
    %v526 = vadd.f32 %v524, %v525
    %v527 = vtanh.pop %v526
    %v528 = vmul.f32 %v523, %v527
    %529 = vmatprep.subr.mxu0 0.0
    %530 = vmatpush1.msra.mxu0 %v240
    %531 = vmatprep.subr.mxu0 0.0
    %532 = vmatpush1.msra.mxu0 %v241
    %533 = vmatprep.subr.mxu0 0.0
    %534 = vmatpush1.msra.mxu0 %v242
    %535 = vmatprep.subr.mxu0 0.0
    %536 = vmatpush1.msra.mxu0 %v243
    %537 = vmatprep.subr.mxu0 0.0
    %538 = vmatpush1.msra.mxu0 %v244
    %539 = vmatprep.subr.mxu0 0.0
    %540 = vmatpush1.msra.mxu0 %v245
    %541 = vmatprep.subr.mxu0 0.0
    %542 = vmatpush1.msra.mxu0 %v246
    %543 = vmatprep.subr.mxu0 0.0
    %544 = vmatpush1.msra.mxu0 %v247
    %545 = vmatprep.subr.mxu0 0.0
    %546 = vmatpush1.msra.mxu0 %v248
    %547 = vmatprep.subr.mxu0 0.0
    %548 = vmatpush1.msra.mxu0 %v249
    %549 = vmatprep.subr.mxu0 0.0
    %550 = vmatpush1.msra.mxu0 %v250
    %551 = vmatprep.subr.mxu0 0.0
    %552 = vmatpush1.msra.mxu0 %v251
    %553 = vmatprep.subr.mxu0 0.0
    %554 = vmatpush1.msra.mxu0 %v252
    %555 = vmatprep.subr.mxu0 0.0
    %556 = vmatpush1.msra.mxu0 %v253
    %557 = vmatprep.subr.mxu0 0.0
    %558 = vmatpush1.msra.mxu0 %v254
    %559 = vmatprep.subr.mxu0 0.0
    %560 = vmatpush1.msra.mxu0 %v255
    %561 = vmatprep.subr.mxu0 0.0
    %562 = vmatpush1.msra.mxu0 0.0
    %563 = vmatprep.subr.mxu0 0.0
    %564 = vmatpush1.msra.mxu0 0.0
    %565 = vmatprep.subr.mxu0 0.0
    %566 = vmatpush1.msra.mxu0 0.0
    %567 = vmatprep.subr.mxu0 0.0
    %568 = vmatpush1.msra.mxu0 0.0
    %569 = vmatprep.subr.mxu0 0.0
    %570 = vmatpush1.msra.mxu0 0.0
    %571 = vmatprep.subr.mxu0 0.0
    %572 = vmatpush1.msra.mxu0 0.0
    %573 = vmatprep.subr.mxu0 0.0
    %574 = vmatpush1.msra.mxu0 0.0
    %575 = vmatprep.subr.mxu0 0.0
    %576 = vmatpush1.msra.mxu0 0.0
    %577 = vmatprep.subr.mxu0 0.0
    %578 = vmatpush1.msra.mxu0 0.0
    %579 = vmatprep.subr.mxu0 0.0
    %580 = vmatpush1.msra.mxu0 0.0
    %581 = vmatprep.subr.mxu0 0.0
    %582 = vmatpush1.msra.mxu0 0.0
    %583 = vmatprep.subr.mxu0 0.0
    %584 = vmatpush1.msra.mxu0 0.0
    %585 = vmatprep.subr.mxu0 0.0
    %586 = vmatpush1.msra.mxu0 0.0
    %587 = vmatprep.subr.mxu0 0.0
    %588 = vmatpush1.msra.mxu0 0.0
    %589 = vmatprep.subr.mxu0 0.0
    %590 = vmatpush1.msra.mxu0 0.0
    %591 = vmatprep.subr.mxu0 0.0
    %592 = vmatpush1.msra.mxu0 0.0
    %593 = vmatprep.mubr.f32.mxu0 0.0
    %594 = vmatmul.mubr.f32.gmra.mrb[0].mxu0 %v528
    %v595 = vpop.f32.mrb[0].mxu0
    %v596 = vadd.f32 0.0, %v595
    %v597 = vpop.f32.mrb[0].mxu0
    %598 = vdwg.mxu0
    %v599 = vadd.f32 %v217, %v596
    %v600 = vtanh.pop %v599
    %v601 = vxor.u32 %v599, 2147483648
    %v602 = vmul.f32 %v601, 1.442695
    %v603 = vpow.pop %v602
    %v604 = vadd.f32 %v603, 1.0
    %v605 = vrcp.pop %v604
    %v606 = vmul.f32 1.0, %v605
    %v607 = vsel %vm258, %v600, %v606
    %608 = vrot.lane.b32.xlu0 %v607, 96
    %v609 = vpop.permute.xlu0 %608
    %610 = vrot.lane.b32.xlu0 %v607, 64
    %v611 = vpop.permute.xlu0 %610
    %612 = vrot.lane.b32.xlu0 %v607, 32
    %v613 = vpop.permute.xlu0 %612
    %v614 = vmul.f32 %v609, %v526
    %v615 = vmul.f32 %v607, %v611
    %v616 = vadd.f32 %v614, %v615
    %v617 = vtanh.pop %v616
    %v618 = vmul.f32 %v613, %v617
    %619 = vmatprep.subr.mxu0 0.0
    %620 = vmatpush1.msra.mxu0 %v240
    %621 = vmatprep.subr.mxu0 0.0
    %622 = vmatpush1.msra.mxu0 %v241
    %623 = vmatprep.subr.mxu0 0.0
    %624 = vmatpush1.msra.mxu0 %v242
    %625 = vmatprep.subr.mxu0 0.0
    %626 = vmatpush1.msra.mxu0 %v243
    %627 = vmatprep.subr.mxu0 0.0
    %628 = vmatpush1.msra.mxu0 %v244
    %629 = vmatprep.subr.mxu0 0.0
    %630 = vmatpush1.msra.mxu0 %v245
    %631 = vmatprep.subr.mxu0 0.0
    %632 = vmatpush1.msra.mxu0 %v246
    %633 = vmatprep.subr.mxu0 0.0
    %634 = vmatpush1.msra.mxu0 %v247
    %635 = vmatprep.subr.mxu0 0.0
    %636 = vmatpush1.msra.mxu0 %v248
    %637 = vmatprep.subr.mxu0 0.0
    %638 = vmatpush1.msra.mxu0 %v249
    %639 = vmatprep.subr.mxu0 0.0
    %640 = vmatpush1.msra.mxu0 %v250
    %641 = vmatprep.subr.mxu0 0.0
    %642 = vmatpush1.msra.mxu0 %v251
    %643 = vmatprep.subr.mxu0 0.0
    %644 = vmatpush1.msra.mxu0 %v252
    %645 = vmatprep.subr.mxu0 0.0
    %646 = vmatpush1.msra.mxu0 %v253
    %647 = vmatprep.subr.mxu0 0.0
    %648 = vmatpush1.msra.mxu0 %v254
    %649 = vmatprep.subr.mxu0 0.0
    %650 = vmatpush1.msra.mxu0 %v255
    %651 = vmatprep.subr.mxu0 0.0
    %652 = vmatpush1.msra.mxu0 0.0
    %653 = vmatprep.subr.mxu0 0.0
    %654 = vmatpush1.msra.mxu0 0.0
    %655 = vmatprep.subr.mxu0 0.0
    %656 = vmatpush1.msra.mxu0 0.0
    %657 = vmatprep.subr.mxu0 0.0
    %658 = vmatpush1.msra.mxu0 0.0
    %659 = vmatprep.subr.mxu0 0.0
    %660 = vmatpush1.msra.mxu0 0.0
    %661 = vmatprep.subr.mxu0 0.0
    %662 = vmatpush1.msra.mxu0 0.0
    %663 = vmatprep.subr.mxu0 0.0
    %664 = vmatpush1.msra.mxu0 0.0
    %665 = vmatprep.subr.mxu0 0.0
    %666 = vmatpush1.msra.mxu0 0.0
    %667 = vmatprep.subr.mxu0 0.0
    %668 = vmatpush1.msra.mxu0 0.0
    %669 = vmatprep.subr.mxu0 0.0
    %670 = vmatpush1.msra.mxu0 0.0
    %671 = vmatprep.subr.mxu0 0.0
    %672 = vmatpush1.msra.mxu0 0.0
    %673 = vmatprep.subr.mxu0 0.0
    %674 = vmatpush1.msra.mxu0 0.0
    %675 = vmatprep.subr.mxu0 0.0
    %676 = vmatpush1.msra.mxu0 0.0
    %677 = vmatprep.subr.mxu0 0.0
    %678 = vmatpush1.msra.mxu0 0.0
    %679 = vmatprep.subr.mxu0 0.0
    %680 = vmatpush1.msra.mxu0 0.0
    %681 = vmatprep.subr.mxu0 0.0
    %682 = vmatpush1.msra.mxu0 0.0
    %683 = vmatprep.mubr.f32.mxu0 0.0
    %684 = vmatmul.mubr.f32.gmra.mrb[0].mxu0 %v618
    %v685 = vpop.f32.mrb[0].mxu0
    %v686 = vadd.f32 0.0, %v685
    %v687 = vpop.f32.mrb[0].mxu0
    %688 = vdwg.mxu0
    %v689 = vadd.f32 %v222, %v686
    %v690 = vtanh.pop %v689
    %v691 = vxor.u32 %v689, 2147483648
    %v692 = vmul.f32 %v691, 1.442695
    %v693 = vpow.pop %v692
    %v694 = vadd.f32 %v693, 1.0
    %v695 = vrcp.pop %v694
    %v696 = vmul.f32 1.0, %v695
    %v697 = vsel %vm258, %v690, %v696
    %698 = vrot.lane.b32.xlu0 %v697, 96
    %v699 = vpop.permute.xlu0 %698
    %700 = vrot.lane.b32.xlu0 %v697, 64
    %v701 = vpop.permute.xlu0 %700
    %702 = vrot.lane.b32.xlu0 %v697, 32
    %v703 = vpop.permute.xlu0 %702
    %v704 = vmul.f32 %v699, %v616
    %v705 = vmul.f32 %v697, %v701
    %v706 = vadd.f32 %v704, %v705
    %v707 = vtanh.pop %v706
    %v708 = vmul.f32 %v703, %v707
    %709 = vmatprep.subr.mxu0 0.0
    %710 = vmatpush1.msra.mxu0 %v240
    %711 = vmatprep.subr.mxu0 0.0
    %712 = vmatpush1.msra.mxu0 %v241
    %713 = vmatprep.subr.mxu0 0.0
    %714 = vmatpush1.msra.mxu0 %v242
    %715 = vmatprep.subr.mxu0 0.0
    %716 = vmatpush1.msra.mxu0 %v243
    %717 = vmatprep.subr.mxu0 0.0
    %718 = vmatpush1.msra.mxu0 %v244
    %719 = vmatprep.subr.mxu0 0.0
    %720 = vmatpush1.msra.mxu0 %v245
    %721 = vmatprep.subr.mxu0 0.0
    %722 = vmatpush1.msra.mxu0 %v246
    %723 = vmatprep.subr.mxu0 0.0
    %724 = vmatpush1.msra.mxu0 %v247
    %725 = vmatprep.subr.mxu0 0.0
    %726 = vmatpush1.msra.mxu0 %v248
    %727 = vmatprep.subr.mxu0 0.0
    %728 = vmatpush1.msra.mxu0 %v249
    %729 = vmatprep.subr.mxu0 0.0
    %730 = vmatpush1.msra.mxu0 %v250
    %731 = vmatprep.subr.mxu0 0.0
    %732 = vmatpush1.msra.mxu0 %v251
    %733 = vmatprep.subr.mxu0 0.0
    %734 = vmatpush1.msra.mxu0 %v252
    %735 = vmatprep.subr.mxu0 0.0
    %736 = vmatpush1.msra.mxu0 %v253
    %737 = vmatprep.subr.mxu0 0.0
    %738 = vmatpush1.msra.mxu0 %v254
    %739 = vmatprep.subr.mxu0 0.0
    %740 = vmatpush1.msra.mxu0 %v255
    %741 = vmatprep.subr.mxu0 0.0
    %742 = vmatpush1.msra.mxu0 0.0
    %743 = vmatprep.subr.mxu0 0.0
    %744 = vmatpush1.msra.mxu0 0.0
    %745 = vmatprep.subr.mxu0 0.0
    %746 = vmatpush1.msra.mxu0 0.0
    %747 = vmatprep.subr.mxu0 0.0
    %748 = vmatpush1.msra.mxu0 0.0
    %749 = vmatprep.subr.mxu0 0.0
    %750 = vmatpush1.msra.mxu0 0.0
    %751 = vmatprep.subr.mxu0 0.0
    %752 = vmatpush1.msra.mxu0 0.0
    %753 = vmatprep.subr.mxu0 0.0
    %754 = vmatpush1.msra.mxu0 0.0
    %755 = vmatprep.subr.mxu0 0.0
    %756 = vmatpush1.msra.mxu0 0.0
    %757 = vmatprep.subr.mxu0 0.0
    %758 = vmatpush1.msra.mxu0 0.0
    %759 = vmatprep.subr.mxu0 0.0
    %760 = vmatpush1.msra.mxu0 0.0
    %761 = vmatprep.subr.mxu0 0.0
    %762 = vmatpush1.msra.mxu0 0.0
    %763 = vmatprep.subr.mxu0 0.0
    %764 = vmatpush1.msra.mxu0 0.0
    %765 = vmatprep.subr.mxu0 0.0
    %766 = vmatpush1.msra.mxu0 0.0
    %767 = vmatprep.subr.mxu0 0.0
    %768 = vmatpush1.msra.mxu0 0.0
    %769 = vmatprep.subr.mxu0 0.0
    %770 = vmatpush1.msra.mxu0 0.0
    %771 = vmatprep.subr.mxu0 0.0
    %772 = vmatpush1.msra.mxu0 0.0
    %773 = vmatprep.mubr.f32.mxu0 0.0
    %774 = vmatmul.mubr.f32.gmra.mrb[0].mxu0 %v708
    %v775 = vpop.f32.mrb[0].mxu0
    %v776 = vadd.f32 0.0, %v775
    %v777 = vpop.f32.mrb[0].mxu0
    %778 = vdwg.mxu0
    %v779 = vadd.f32 %v227, %v776
    %v780 = vtanh.pop %v779
    %v781 = vxor.u32 %v779, 2147483648
    %v782 = vmul.f32 %v781, 1.442695
    %v783 = vpow.pop %v782
    %v784 = vadd.f32 %v783, 1.0
    %v785 = vrcp.pop %v784
    %v786 = vmul.f32 1.0, %v785
    %v787 = vsel %vm258, %v780, %v786
    %788 = vrot.lane.b32.xlu0 %v787, 96
    %v789 = vpop.permute.xlu0 %788
    %790 = vrot.lane.b32.xlu0 %v787, 64
    %v791 = vpop.permute.xlu0 %790
    %792 = vrot.lane.b32.xlu0 %v787, 32
    %v793 = vpop.permute.xlu0 %792
    %v794 = vmul.f32 %v789, %v706
    %v795 = vmul.f32 %v787, %v791
    %v796 = vadd.f32 %v794, %v795
    %v797 = vtanh.pop %v796
    %v798 = vmul.f32 %v793, %v797
    %799 = vmatprep.subr.mxu0 0.0
    %800 = vmatpush1.msra.mxu0 %v240
    %801 = vmatprep.subr.mxu0 0.0
    %802 = vmatpush1.msra.mxu0 %v241
    %803 = vmatprep.subr.mxu0 0.0
    %804 = vmatpush1.msra.mxu0 %v242
    %805 = vmatprep.subr.mxu0 0.0
    %806 = vmatpush1.msra.mxu0 %v243
    %807 = vmatprep.subr.mxu0 0.0
    %808 = vmatpush1.msra.mxu0 %v244
    %809 = vmatprep.subr.mxu0 0.0
    %810 = vmatpush1.msra.mxu0 %v245
    %811 = vmatprep.subr.mxu0 0.0
    %812 = vmatpush1.msra.mxu0 %v246
    %813 = vmatprep.subr.mxu0 0.0
    %814 = vmatpush1.msra.mxu0 %v247
    %815 = vmatprep.subr.mxu0 0.0
    %816 = vmatpush1.msra.mxu0 %v248
    %817 = vmatprep.subr.mxu0 0.0
    %818 = vmatpush1.msra.mxu0 %v249
    %819 = vmatprep.subr.mxu0 0.0
    %820 = vmatpush1.msra.mxu0 %v250
    %821 = vmatprep.subr.mxu0 0.0
    %822 = vmatpush1.msra.mxu0 %v251
    %823 = vmatprep.subr.mxu0 0.0
    %824 = vmatpush1.msra.mxu0 %v252
    %825 = vmatprep.subr.mxu0 0.0
    %826 = vmatpush1.msra.mxu0 %v253
    %827 = vmatprep.subr.mxu0 0.0
    %828 = vmatpush1.msra.mxu0 %v254
    %829 = vmatprep.subr.mxu0 0.0
    %830 = vmatpush1.msra.mxu0 %v255
    %831 = vmatprep.subr.mxu0 0.0
    %832 = vmatpush1.msra.mxu0 0.0
    %833 = vmatprep.subr.mxu0 0.0
    %834 = vmatpush1.msra.mxu0 0.0
    %835 = vmatprep.subr.mxu0 0.0
    %836 = vmatpush1.msra.mxu0 0.0
    %837 = vmatprep.subr.mxu0 0.0
    %838 = vmatpush1.msra.mxu0 0.0
    %839 = vmatprep.subr.mxu0 0.0
    %840 = vmatpush1.msra.mxu0 0.0
    %841 = vmatprep.subr.mxu0 0.0
    %842 = vmatpush1.msra.mxu0 0.0
    %843 = vmatprep.subr.mxu0 0.0
    %844 = vmatpush1.msra.mxu0 0.0
    %845 = vmatprep.subr.mxu0 0.0
    %846 = vmatpush1.msra.mxu0 0.0
    %847 = vmatprep.subr.mxu0 0.0
    %848 = vmatpush1.msra.mxu0 0.0
    %849 = vmatprep.subr.mxu0 0.0
    %850 = vmatpush1.msra.mxu0 0.0
    %851 = vmatprep.subr.mxu0 0.0
    %852 = vmatpush1.msra.mxu0 0.0
    %853 = vmatprep.subr.mxu0 0.0
    %854 = vmatpush1.msra.mxu0 0.0
    %855 = vmatprep.subr.mxu0 0.0
    %856 = vmatpush1.msra.mxu0 0.0
    %857 = vmatprep.subr.mxu0 0.0
    %858 = vmatpush1.msra.mxu0 0.0
    %859 = vmatprep.subr.mxu0 0.0
    %860 = vmatpush1.msra.mxu0 0.0
    %861 = vmatprep.subr.mxu0 0.0
    %862 = vmatpush1.msra.mxu0 0.0
    %863 = vmatprep.mubr.f32.mxu0 0.0
    %864 = vmatmul.mubr.f32.gmra.mrb[0].mxu0 %v798
    %v865 = vpop.f32.mrb[0].mxu0
    %v866 = vadd.f32 0.0, %v865
    %v867 = vpop.f32.mrb[0].mxu0
    %868 = vdwg.mxu0
    %v869 = vadd.f32 %v232, %v866
    %v870 = vtanh.pop %v869
    %v871 = vxor.u32 %v869, 2147483648
    %v872 = vmul.f32 %v871, 1.442695
    %v873 = vpow.pop %v872
    %v874 = vadd.f32 %v873, 1.0
    %v875 = vrcp.pop %v874
    %v876 = vmul.f32 1.0, %v875
    %v877 = vsel %vm258, %v870, %v876
    %878 = vrot.lane.b32.xlu0 %v877, 96
    %v879 = vpop.permute.xlu0 %878
    %880 = vrot.lane.b32.xlu0 %v877, 64
    %v881 = vpop.permute.xlu0 %880
    %882 = vrot.lane.b32.xlu0 %v877, 32
    %v883 = vpop.permute.xlu0 %882
    %v884 = vmul.f32 %v879, %v796
    %v885 = vmul.f32 %v877, %v881
    %v886 = vadd.f32 %v884, %v885
    %v887 = vtanh.pop %v886
    %v888 = vmul.f32 %v883, %v887
    %889 = vmatprep.subr.mxu0 0.0
    %890 = vmatpush1.msra.mxu0 %v240
    %891 = vmatprep.subr.mxu0 0.0
    %892 = vmatpush1.msra.mxu0 %v241
    %893 = vmatprep.subr.mxu0 0.0
    %894 = vmatpush1.msra.mxu0 %v242
    %895 = vmatprep.subr.mxu0 0.0
    %896 = vmatpush1.msra.mxu0 %v243
    %897 = vmatprep.subr.mxu0 0.0
    %898 = vmatpush1.msra.mxu0 %v244
    %899 = vmatprep.subr.mxu0 0.0
    %900 = vmatpush1.msra.mxu0 %v245
    %901 = vmatprep.subr.mxu0 0.0
    %902 = vmatpush1.msra.mxu0 %v246
    %903 = vmatprep.subr.mxu0 0.0
    %904 = vmatpush1.msra.mxu0 %v247
    %905 = vmatprep.subr.mxu0 0.0
    %906 = vmatpush1.msra.mxu0 %v248
    %907 = vmatprep.subr.mxu0 0.0
    %908 = vmatpush1.msra.mxu0 %v249
    %909 = vmatprep.subr.mxu0 0.0
    %910 = vmatpush1.msra.mxu0 %v250
    %911 = vmatprep.subr.mxu0 0.0
    %912 = vmatpush1.msra.mxu0 %v251
    %913 = vmatprep.subr.mxu0 0.0
    %914 = vmatpush1.msra.mxu0 %v252
    %915 = vmatprep.subr.mxu0 0.0
    %916 = vmatpush1.msra.mxu0 %v253
    %917 = vmatprep.subr.mxu0 0.0
    %918 = vmatpush1.msra.mxu0 %v254
    %919 = vmatprep.subr.mxu0 0.0
    %920 = vmatpush1.msra.mxu0 %v255
    %921 = vmatprep.subr.mxu0 0.0
    %922 = vmatpush1.msra.mxu0 0.0
    %923 = vmatprep.subr.mxu0 0.0
    %924 = vmatpush1.msra.mxu0 0.0
    %925 = vmatprep.subr.mxu0 0.0
    %926 = vmatpush1.msra.mxu0 0.0
    %927 = vmatprep.subr.mxu0 0.0
    %928 = vmatpush1.msra.mxu0 0.0
    %929 = vmatprep.subr.mxu0 0.0
    %930 = vmatpush1.msra.mxu0 0.0
    %931 = vmatprep.subr.mxu0 0.0
    %932 = vmatpush1.msra.mxu0 0.0
    %933 = vmatprep.subr.mxu0 0.0
    %934 = vmatpush1.msra.mxu0 0.0
    %935 = vmatprep.subr.mxu0 0.0
    %936 = vmatpush1.msra.mxu0 0.0
    %937 = vmatprep.subr.mxu0 0.0
    %938 = vmatpush1.msra.mxu0 0.0
    %939 = vmatprep.subr.mxu0 0.0
    %940 = vmatpush1.msra.mxu0 0.0
    %941 = vmatprep.subr.mxu0 0.0
    %942 = vmatpush1.msra.mxu0 0.0
    %943 = vmatprep.subr.mxu0 0.0
    %944 = vmatpush1.msra.mxu0 0.0
    %945 = vmatprep.subr.mxu0 0.0
    %946 = vmatpush1.msra.mxu0 0.0
    %947 = vmatprep.subr.mxu0 0.0
    %948 = vmatpush1.msra.mxu0 0.0
    %949 = vmatprep.subr.mxu0 0.0
    %950 = vmatpush1.msra.mxu0 0.0
    %951 = vmatprep.subr.mxu0 0.0
    %952 = vmatpush1.msra.mxu0 0.0
    %953 = vmatprep.mubr.f32.mxu0 0.0
    %954 = vmatmul.mubr.f32.gmra.mrb[0].mxu0 %v888
    %v955 = vpop.f32.mrb[0].mxu0
    %v956 = vadd.f32 0.0, %v955
    %v957 = vpop.f32.mrb[0].mxu0
    %958 = vdwg.mxu0
    %v959 = vadd.f32 %v237, %v956
    %v960 = vtanh.pop %v959
    %v961 = vxor.u32 %v959, 2147483648
    %v962 = vmul.f32 %v961, 1.442695
    %v963 = vpow.pop %v962
    %v964 = vadd.f32 %v963, 1.0
    %v965 = vrcp.pop %v964
    %v966 = vmul.f32 1.0, %v965
    %v967 = vsel %vm258, %v960, %v966
    %968 = vrot.lane.b32.xlu0 %v967, 96
    %v969 = vpop.permute.xlu0 %968
    %970 = vrot.lane.b32.xlu0 %v967, 64
    %v971 = vpop.permute.xlu0 %970
    %972 = vrot.lane.b32.xlu0 %v967, 32
    %v973 = vpop.permute.xlu0 %972
    %v974 = vmul.f32 %v969, %v886
    %v975 = vmul.f32 %v967, %v971
    %v976 = vadd.f32 %v974, %v975
    %v977 = vtanh.pop %v976
    %v978 = vmul.f32 %v973, %v977
    %v979 = vld [vmem:[#allocation6] sm:$0xff]
    %v980 = vld [vmem:[#allocation6 + $0x8] sm:$0xff]
    %v981 = vld [vmem:[#allocation6 + $0x10] sm:$0xff]
    %v982 = vld [vmem:[#allocation6 + $0x18] sm:$0xff]
    %v983 = vld [vmem:[#allocation6 + $0x20] sm:$0xff]
    %v984 = vld [vmem:[#allocation6 + $0x28] sm:$0xff]
    %v985 = vld [vmem:[#allocation6 + $0x30] sm:$0xff]
    %v986 = vld [vmem:[#allocation6 + $0x38] sm:$0xff]
    %v987 = vld [vmem:[#allocation6 + $0x40] sm:$0xff]
    %v988 = vld [vmem:[#allocation6 + $0x48] sm:$0xff]
    %v989 = vld [vmem:[#allocation6 + $0x50] sm:$0xff]
    %v990 = vld [vmem:[#allocation6 + $0x58] sm:$0xff]
    %v991 = vld [vmem:[#allocation6 + $0x60] sm:$0xff]
    %v992 = vld [vmem:[#allocation6 + $0x68] sm:$0xff]
    %v993 = vld [vmem:[#allocation6 + $0x70] sm:$0xff]
    %v994 = vld [vmem:[#allocation6 + $0x78] sm:$0xff]
    %v995 = vld [vmem:[%s4] sm:$0x1]
    %v997 = vlaneseq
    %v998 = vshrl.u32 %v997, 7
    %v999 = vsub.s32 0, %v998
    %v1000 = vrot.slane %v995, %v999
    %1002 = vmatprep.subr.mxu0 0.0
    %1003 = vmatpush1.msra.mxu0 %v979
    %1004 = vmatprep.subr.mxu0 0.0
    %1005 = vmatpush1.msra.mxu0 %v980
    %1006 = vmatprep.subr.mxu0 0.0
    %1007 = vmatpush1.msra.mxu0 %v981
    %1008 = vmatprep.subr.mxu0 0.0
    %1009 = vmatpush1.msra.mxu0 %v982
    %1010 = vmatprep.subr.mxu0 0.0
    %1011 = vmatpush1.msra.mxu0 %v983
    %1012 = vmatprep.subr.mxu0 0.0
    %1013 = vmatpush1.msra.mxu0 %v984
    %1014 = vmatprep.subr.mxu0 0.0
    %1015 = vmatpush1.msra.mxu0 %v985
    %1016 = vmatprep.subr.mxu0 0.0
    %1017 = vmatpush1.msra.mxu0 %v986
    %1018 = vmatprep.subr.mxu0 0.0
    %1019 = vmatpush1.msra.mxu0 %v987
    %1020 = vmatprep.subr.mxu0 0.0
    %1021 = vmatpush1.msra.mxu0 %v988
    %1022 = vmatprep.subr.mxu0 0.0
    %1023 = vmatpush1.msra.mxu0 %v989
    %1024 = vmatprep.subr.mxu0 0.0
    %1025 = vmatpush1.msra.mxu0 %v990
    %1026 = vmatprep.subr.mxu0 0.0
    %1027 = vmatpush1.msra.mxu0 %v991
    %1028 = vmatprep.subr.mxu0 0.0
    %1029 = vmatpush1.msra.mxu0 %v992
    %1030 = vmatprep.subr.mxu0 0.0
    %1031 = vmatpush1.msra.mxu0 %v993
    %1032 = vmatprep.subr.mxu0 0.0
    %1033 = vmatpush1.msra.mxu0 %v994
    %1034 = vmatprep.subr.mxu0 0.0
    %1035 = vmatpush1.msra.mxu0 0.0
    %1036 = vmatprep.subr.mxu0 0.0
    %1037 = vmatpush1.msra.mxu0 0.0
    %1038 = vmatprep.subr.mxu0 0.0
    %1039 = vmatpush1.msra.mxu0 0.0
    %1040 = vmatprep.subr.mxu0 0.0
    %1041 = vmatpush1.msra.mxu0 0.0
    %1042 = vmatprep.subr.mxu0 0.0
    %1043 = vmatpush1.msra.mxu0 0.0
    %1044 = vmatprep.subr.mxu0 0.0
    %1045 = vmatpush1.msra.mxu0 0.0
    %1046 = vmatprep.subr.mxu0 0.0
    %1047 = vmatpush1.msra.mxu0 0.0
    %1048 = vmatprep.subr.mxu0 0.0
    %1049 = vmatpush1.msra.mxu0 0.0
    %1050 = vmatprep.subr.mxu0 0.0
    %1051 = vmatpush1.msra.mxu0 0.0
    %1052 = vmatprep.subr.mxu0 0.0
    %1053 = vmatpush1.msra.mxu0 0.0
    %1054 = vmatprep.subr.mxu0 0.0
    %1055 = vmatpush1.msra.mxu0 0.0
    %1056 = vmatprep.subr.mxu0 0.0
    %1057 = vmatpush1.msra.mxu0 0.0
    %1058 = vmatprep.subr.mxu0 0.0
    %1059 = vmatpush1.msra.mxu0 0.0
    %1060 = vmatprep.subr.mxu0 0.0
    %1061 = vmatpush1.msra.mxu0 0.0
    %1062 = vmatprep.subr.mxu0 0.0
    %1063 = vmatpush1.msra.mxu0 0.0
    %1064 = vmatprep.subr.mxu0 0.0
    %1065 = vmatpush1.msra.mxu0 0.0
    %1066 = vmatprep.mubr.f32.mxu0 0.0
    %1067 = vmatmul.mubr.f32.gmra.mrb[0].mxu0 %v978
    %v1068 = vpop.f32.mrb[0].mxu0
    %v1069 = vadd.f32 %v1000, %v1068
    %v1070 = vpop.f32.mrb[0].mxu0
    %1071 = vdwg.mxu0
    %1072 = vst [vmem:[%s5] sm:$0xff] %v1069
    // Predicated region
    $region34: #{rnn_model_forward.1} parent=1 // pred_check
      _
    $region35: #{rnn_model_forward.1} parent=1 // pred_check_branch
      %1074 = sbr.rel (0) target = $region37
    $region36: #{rnn_model_forward.1} parent=1 // pred_region
      _
    $region37: #{rnn_model_forward.1} parent=1 // pred_fallthru
      _
    // Predicated region
    $region38: #{rnn_model_forward.1} parent=1 // pred_check
      _
    $region39: #{rnn_model_forward.1} parent=1 // pred_check_branch
      %1076 = sbr.rel (0) target = $region41
    $region40: #{rnn_model_forward.1} parent=1 // pred_region
      _
    $region41: #{rnn_model_forward.1} parent=1 // pred_fallthru
      _
    %1077 = vsyncpa [#allocation3], 1
    %1078 = vsyncpa [#allocation5], 1

</llo_original>
